<compile_context>
chip_gen: v7x
topology: tpu7x:2x2x1
jax: 0.10.0
libtpu: 0.0.40
codegen_flags: <defaults>
</compile_context>

<pallas_src>
import functools

import jax
import jax.numpy as jnp
import numpy as np
from jax import lax
from jax.experimental import pallas as pl
from jax.experimental.pallas import tpu as pltpu


def _round_up(v, m):
    return ((v + m - 1) // m) * m


# ---------------------------------------------------------------------------
# One-time parameter preprocessing (hoisted out of the per-forward path).
# fc1 and fc2 are fused into a single padded MLP:
#   h   = relu(x @ [W1a | W1b] + [b1a | b1b])
#   out = h @ blockdiag(W2a, W2b) + [b2a | b2b]  ==  [fc1(x) | fc2(x)]
# ---------------------------------------------------------------------------
def prepare_params(params, mL=3, kernelSize=7):
    W1a, b1a, W2a, b2a = [jnp.asarray(p, jnp.float32) for p in params["fc1"]]
    W1b, b1b, W2b, b2b = [jnp.asarray(p, jnp.float32) for p in params["fc2"]]
    din, dh = W1a.shape
    dout = W2a.shape[1]
    assert dout == mL * kernelSize * kernelSize

    W1c = jnp.concatenate([W1a, W1b], axis=1)                      # (din, 2dh)
    b1c = jnp.concatenate([b1a, b1b], axis=0)                      # (2dh,)
    W2c = (jnp.zeros((2 * dh, 2 * dout), jnp.float32)
           .at[:dh, :dout].set(W2a)
           .at[dh:, dout:].set(W2b))                               # block-diag
    b2c = jnp.concatenate([b2a, b2b], axis=0)                      # (2dout,)

    dinp = _round_up(din, 128)
    dhp = _round_up(2 * dh, 128)
    doutp = _round_up(2 * dout, 128)
    return {
        "W1p": jnp.zeros((dinp, dhp), jnp.float32).at[:din, :2 * dh].set(W1c),
        "b1p": jnp.zeros((1, dhp), jnp.float32).at[0, :2 * dh].set(b1c),
        "W2p": jnp.zeros((dhp, doutp), jnp.float32).at[:2 * dh, :2 * dout].set(W2c),
        "b2p": jnp.zeros((1, doutp), jnp.float32).at[0, :2 * dout].set(b2c),
        "din": din, "dout": dout, "mL": mL, "kernelSize": kernelSize,
    }


# ---------------------------------------------------------------------------
# Pallas kernel 1: fused fc1/fc2 MLP (single MXU block, padded tiles).
# ---------------------------------------------------------------------------
def _mlp_kernel(x_ref, w1_ref, b1_ref, w2_ref, b2_ref, o_ref):
    h = jnp.dot(x_ref[...], w1_ref[...], preferred_element_type=jnp.float32)
    h = jnp.maximum(h + b1_ref[...], 0.0)             # act == 'relu'
    o_ref[...] = (jnp.dot(h, w2_ref[...], preferred_element_type=jnp.float32)
                  + b2_ref[...])


def _fused_mlp(kA_flat, prep):
    B, din = kA_flat.shape
    dout = prep["dout"]
    dinp = prep["W1p"].shape[0]
    doutp = prep["W2p"].shape[1]
    Bp = _round_up(max(B, 8), 8)
    xp = jnp.zeros((Bp, dinp), jnp.float32).at[:B, :din].set(kA_flat)
    out = pl.pallas_call(
        _mlp_kernel,
        out_shape=jax.ShapeDtypeStruct((Bp, doutp), jnp.float32),
    )(xp, prep["W1p"], prep["b1p"], prep["W2p"], prep["b2p"])
    return out[:B, :2 * dout]          # [fc1 taps | fc2 taps], (B, 2*mL*K*K)


# ---------------------------------------------------------------------------
# Pallas kernel 2: the smoother.  One grid step processes B_blk batch planes
# packed side-by-side along the 128-lane axis (B_blk * Wblk == 128).  Each
# block's padded plane lives at scratch lane offsets [b*Wblk, b*Wblk + N+2P),
# data at [b*Wblk+P, +N); the packed outputs live at lane offsets [b*Wblk, +N).
#
# Per step:
#   Ax    = cross-corr(x, kernelA[b], pad=1)
#   r     = f - Ax
#   for c in mL:  tmp_c = cross-corr(r, weight1[b,c], pad=P), cropped to NxN
#                 g    += cross-corr(tmp_c, weight2[b,c], pad=P)
#   out   = x + g
# ---------------------------------------------------------------------------
def _smoother_kernel(taps_ref, x_ref, f_ref, o_ref, rpad, tpad, wrep,
                     *, N, mL, K, Wblk, B_blk):
    P = K // 2
    L = 128
    f32 = jnp.float32
    NACC = 4   # independent partial accumulators (break the serial add chain)

    # -- 1. zero both padded scratch planes in full (a few aligned vreg
    #       stores).  Guarantees every padding row/column the shifted windows
    #       read is a true zero -- this was the NaN-from-uninitialised-VMEM bug.
    rpad[...] = jnp.zeros_like(rpad)
    tpad[...] = jnp.zeros_like(tpad)

    # -- 2. expand the un-replicated per-sample taps (Dp, B_blk) to the packed
    #       128-lane layout once per grid step (weights ship un-inflated).
    tv = taps_ref[...]
    w = jnp.broadcast_to(tv[:, 0:1], wrep.shape)
    if B_blk > 1:
        lane_d = lax.broadcasted_iota(jnp.int32, wrep.shape, 1)
        for j in range(1, B_blk):
            w = jnp.where(lane_d >= j * Wblk,
                          jnp.broadcast_to(tv[:, j:j + 1], wrep.shape), w)
    wrep[...] = w

    def tap(row):
        # TODO(synk): wrep[pl.ds(row, N, stride=0), :] would deliver the row
        # already sublane-broadcast in one strided vld; plain row read kept
        # here for interpret-mode portability.
        return wrep[row:row + 1, :]

    # -- 3. stage x / f planes into the padded scratch at their lane block.
    for b in range(B_blk):
        base = b * Wblk + P
        rpad[P:P + N, base:base + N] = x_ref[b]
        tpad[P:P + N, base:base + N] = f_ref[b]

    xv = rpad[P:P + N, P:P + L]        # packed x, output-lane coordinates
    fv = tpad[P:P + N, P:P + L]        # packed f

    lane = lax.broadcasted_iota(jnp.int32, (N, L), 1)
    valid = (lane % Wblk) < N          # lanes that hold real data in each block

    def psum(p):
        return (p[0] + p[1]) + (p[2] + p[3])

    def zeros4():
        return [jnp.zeros((N, L), f32) for _ in range(NACC)]

    # -- 4. Ax = cross-corr(x, kernelA, pad=1);  r = f - Ax -------------------
    parts = zeros4()
    t = 0
    for dy in range(3):
        for dx in range(3):
            win = rpad[P - 1 + dy:P - 1 + dy + N, P - 1 + dx:P - 1 + dx + L]
            parts[t % NACC] += tap(dy * 3 + dx) * win
            t += 1
    r_val = jnp.where(valid, fv - psum(parts), 0.0)
    rpad[P:P + N, P:P + L] = r_val     # residual, re-padded in place

    # -- 5. G2 = conv2(crop(conv1(r))), mL channels one at a time -------------
    gparts = zeros4()
    gparts[0] = gparts[0] + xv         # out = x + G2
    for c in range(mL):
        tparts = zeros4()
        base1 = 9 + c * K * K
        t = 0
        for dy in range(K):
            for dx in range(K):
                win = rpad[dy:dy + N, dx:dx + L]     # window read from the ref
                tparts[t % NACC] += tap(base1 + dy * K + dx) * win
                t += 1
        # crop to NxN (mask) and re-pad for the second conv
        tpad[P:P + N, P:P + L] = jnp.where(valid, psum(tparts), 0.0)

        base2 = 9 + mL * K * K + c * K * K
        t = 0
        for dy in range(K):
            for dx in range(K):
                win = tpad[dy:dy + N, dx:dx + L]
                gparts[t % NACC] += tap(base2 + dy * K + dx) * win
                t += 1

    o_ref[...] = jnp.where(valid, psum(gparts), 0.0)


def _choose_packing(B, N, P):
    """Pick (B_blk, Wblk, nch) with B_blk * Wblk == 128 (lane-dense blocks)."""
    wmin = N + 2 * P
    if wmin > 128:
        raise ValueError("padded plane wider than 128 lanes is not supported")
    b_max = 1
    while b_max < 128 and 128 // (b_max * 2) >= wmin:
        b_max *= 2
    # Keep at least 2 grid steps when B > 1 so both v7x TensorCores get work.
    b_blk = min(b_max, max(1, (B + 1) // 2))
    b_blk = 1 << (b_blk.bit_length() - 1)          # power of two -> divides 128
    wblk = 128 // b_blk
    nch = -(-B // b_blk)
    return b_blk, wblk, nch


def _vmem_limit_bytes():
    # Cap comfortably below the physical VMEM of the current generation
    # (64 MiB per TensorCore on v7x, 128 MiB on v5e/v6e).
    try:
        cap = int(pltpu.get_tpu_info().vmem_capacity_bytes)
    except Exception:
        cap = 64 << 20
    return int(min(cap - (16 << 20), 32 << 20))


def meta_conv_smoother(x, f, kernelA, prep):
    mL = prep["mL"]
    K = prep["kernelSize"]
    assert K % 2 == 1 and K >= 3
    P = K // 2
    B, _, N, _ = x.shape
    assert kernelA.shape == (B, 1, 3, 3)

    kA_flat = kernelA.reshape(B, 9).astype(jnp.float32)

    # fc1 / fc2 -> per-sample smoother taps (one fused, padded MXU call).
    mlp_taps = _fused_mlp(kA_flat, prep)                       # (B, 2*mL*K*K)
    taps_all = jnp.concatenate([kA_flat, mlp_taps], axis=1)    # (B, 9+2*mL*K*K)

    D = 9 + 2 * mL * K * K
    Dp = _round_up(D, 8)
    B_blk, Wblk, nch = _choose_packing(B, N, P)
    Bpad = nch * B_blk

    taps_pad = jnp.zeros((Bpad, Dp), jnp.float32).at[:B, :D].set(taps_all)
    taps_blk = taps_pad.reshape(nch, B_blk, Dp).transpose(0, 2, 1)  # (nch,Dp,B_blk)

    xpad = jnp.zeros((Bpad, N, N), jnp.float32).at[:B].set(x[:, 0].astype(jnp.float32))
    fpad = jnp.zeros((Bpad, N, N), jnp.float32).at[:B].set(f[:, 0].astype(jnp.float32))

    Hp = _round_up(N + 2 * P, 8)           # padded-plane rows (sublane aligned)
    Wscr = _round_up(128 + 2 * P, 128)     # padded-plane lanes (lane aligned)

    kernel = functools.partial(_smoother_kernel, N=N, mL=mL, K=K,
                               Wblk=Wblk, B_blk=B_blk)

    out_packed = pl.pallas_call(
        kernel,
        out_shape=jax.ShapeDtypeStruct((nch, N, 128), jnp.float32),
        grid=(nch,),
        in_specs=[
            pl.BlockSpec((None, Dp, B_blk), lambda i: (i, 0, 0)),   # taps
            pl.BlockSpec((B_blk, N, N), lambda i: (i, 0, 0)),       # x planes
            pl.BlockSpec((B_blk, N, N), lambda i: (i, 0, 0)),       # f planes
        ],
        out_specs=pl.BlockSpec((None, N, 128), lambda i: (i, 0, 0)),
        scratch_shapes=[
            pltpu.VMEM((Hp, Wscr), jnp.float32),   # rpad (x, then residual)
            pltpu.VMEM((Hp, Wscr), jnp.float32),   # tpad (f staging, then tmp_c)
            pltpu.VMEM((Dp, 128), jnp.float32),    # lane-replicated taps
        ],
        compiler_params=pltpu.CompilerParams(
            dimension_semantics=("parallel",),
            vmem_limit_bytes=_vmem_limit_bytes()),
    )(taps_blk, xpad, fpad)

    # Unpack (nch, N, 128) -> (B, 1, N, N): block b's data sits at lane
    # offsets [0, N) of its Wblk-wide lane block.
    out = out_packed.reshape(nch, N, B_blk, Wblk)[..., :N]
    out = out.transpose(0, 2, 1, 3).reshape(Bpad, N, N)[:B]
    return out[:, None, :, :]


# ---------------------------------------------------------------------------
# Pure-JAX reference (mirrors the PyTorch forward) for correctness checking.
# ---------------------------------------------------------------------------
def reference_forward(x, f, kernelA, params, mL=3, kernelSize=7):
    B, _, N, _ = x.shape
    K = kernelSize
    P = K // 2
    w = kernelA.reshape(B, 9)

    def mlp(v, p):
        W1, b1, W2, b2 = p
        h = jnp.maximum(jnp.dot(v, W1, precision=lax.Precision.HIGHEST) + b1, 0.0)
        return jnp.dot(h, W2, precision=lax.Precision.HIGHEST) + b2

    weight1 = mlp(w, params["fc1"]).reshape(B, mL, 1, K, K)
    weight2 = mlp(w, params["fc2"]).reshape(B, 1, mL, K, K)

    dn = ("NCHW", "OIHW", "NCHW")
    Ax = lax.conv_general_dilated(
        x.reshape(1, B, N, N), kernelA, (1, 1), [(1, 1), (1, 1)],
        feature_group_count=B, dimension_numbers=dn,
        precision=lax.Precision.HIGHEST).reshape(B, 1, N, N)
    r = f - Ax
    outs = []
    for i in range(B):
        tmp = lax.conv_general_dilated(
            r[i:i + 1], weight1[i], (1, 1), [(P, P), (P, P)],
            dimension_numbers=dn, precision=lax.Precision.HIGHEST)
        g = lax.conv_general_dilated(
            tmp, weight2[i], (1, 1), [(P, P), (P, P)],
            dimension_numbers=dn, precision=lax.Precision.HIGHEST)
        outs.append(g)
    G2 = jnp.concatenate(outs, axis=0)
    return x + G2


if __name__ == "__main__":
    B, N, mL, K = 2, 16, 3, 7

    key = jax.random.PRNGKey(0)
    ks = jax.random.split(key, 8)
    x = jax.random.normal(ks[0], (B, 1, N, N), jnp.float32)
    f = jax.random.normal(ks[1], (B, 1, N, N), jnp.float32)
    kernelA = jax.random.normal(ks[2], (B, 1, 3, 3), jnp.float32)

    def init_fc(k):
        k1, k2, k3, k4 = jax.random.split(k, 4)
        W1 = 0.1 * jax.random.normal(k1, (9, 100), jnp.float32)
        b1 = 0.1 * jax.random.normal(k2, (100,), jnp.float32)
        W2 = 0.05 * jax.random.normal(k3, (100, mL * K * K), jnp.float32)
        b2 = 0.05 * jax.random.normal(k4, (mL * K * K,), jnp.float32)
        return (W1, b1, W2, b2)

    params = {"fc1": init_fc(ks[3]), "fc2": init_fc(ks[4])}
    prep = prepare_params(params, mL=mL, kernelSize=K)   # hoisted, called once

    out = meta_conv_smoother(x, f, kernelA, prep)
    out = jax.block_until_ready(out)

    ref = jax.block_until_ready(
        reference_forward(x, f, kernelA, params, mL=mL, kernelSize=K))

    np.testing.assert_allclose(np.asarray(out), np.asarray(ref), rtol=2e-2, atol=2e-2)
    print("KERNEL_OK")
</pallas_src>

<mosaic_0001>
module attributes {stable_mosaic.version = 11 : i64} {
  func.func @_mlp_kernel(%arg0: memref<8x128xf32, #tpu.memory_space<vmem>>, %arg1: memref<128x256xf32, #tpu.memory_space<vmem>>, %arg2: memref<1x256xf32, #tpu.memory_space<vmem>>, %arg3: memref<256x384xf32, #tpu.memory_space<vmem>>, %arg4: memref<1x384xf32, #tpu.memory_space<vmem>>, %arg5: memref<8x384xf32, #tpu.memory_space<vmem>>) attributes {dimension_semantics = [], scalar_prefetch = 0 : i64, scratch_operands = 0 : i64, tpu.core_type = #tpu.core_type<tc>} {
    %c0 = arith.constant 0 : index
    %c0_0 = arith.constant 0 : index
    %0 = vector.load %arg0[%c0, %c0_0] : memref<8x128xf32, #tpu.memory_space<vmem>>, vector<8x128xf32>
    %c0_1 = arith.constant 0 : index
    %c0_2 = arith.constant 0 : index
    %1 = vector.load %arg1[%c0_1, %c0_2] : memref<128x256xf32, #tpu.memory_space<vmem>>, vector<128x256xf32>
    %cst = arith.constant dense<0.000000e+00> : vector<8x256xf32>
    %2 = tpu.matmul %0, %1, %cst {dimension_numbers = #tpu.dot_dimension_numbers<[1], [0], [0], [1], [0, 0, 1, 1], [], []>} : vector<8x128xf32>, vector<128x256xf32>, vector<8x256xf32> -> vector<8x256xf32>
    %c0_3 = arith.constant 0 : index
    %c0_4 = arith.constant 0 : index
    %3 = vector.load %arg2[%c0_3, %c0_4] : memref<1x256xf32, #tpu.memory_space<vmem>>, vector<1x256xf32>
    %4 = vector.broadcast %3 : vector<1x256xf32> to vector<8x256xf32>
    %5 = arith.addf %2, %4 : vector<8x256xf32>
    %cst_5 = arith.constant 0.000000e+00 : f32
    %6 = vector.broadcast %cst_5 : f32 to vector<8x256xf32>
    %7 = arith.maximumf %5, %6 : vector<8x256xf32>
    %c0_6 = arith.constant 0 : index
    %c0_7 = arith.constant 0 : index
    %8 = vector.load %arg3[%c0_6, %c0_7] : memref<256x384xf32, #tpu.memory_space<vmem>>, vector<256x384xf32>
    %cst_8 = arith.constant dense<0.000000e+00> : vector<8x384xf32>
    %9 = tpu.matmul %7, %8, %cst_8 {dimension_numbers = #tpu.dot_dimension_numbers<[1], [0], [0], [1], [0, 0, 1, 1], [], []>} : vector<8x256xf32>, vector<256x384xf32>, vector<8x384xf32> -> vector<8x384xf32>
    %c0_9 = arith.constant 0 : index
    %c0_10 = arith.constant 0 : index
    %10 = vector.load %arg4[%c0_9, %c0_10] : memref<1x384xf32, #tpu.memory_space<vmem>>, vector<1x384xf32>
    %11 = vector.broadcast %10 : vector<1x384xf32> to vector<8x384xf32>
    %12 = arith.addf %9, %11 : vector<8x384xf32>
    %c0_11 = arith.constant 0 : index
    %c0_12 = arith.constant 0 : index
    %13 = vector.load %arg5[%c0_11, %c0_12] : memref<8x384xf32, #tpu.memory_space<vmem>>, vector<8x384xf32>
    tpu.vector_store %arg5[%c0_11, %c0_12], %12 {strides = array<i32>} : memref<8x384xf32, #tpu.memory_space<vmem>>, vector<8x384xf32>,
    return
  }
}

</mosaic_0001>

<llo_original>
// kernel: tpu_custom_call.1
$region0: #{tpu_custom_call.1}
  #allocation0 [shape = 'u32[]', space=smem, size = 0x4, offset = 0x4, fixed_abs, tag = 'smem constant byte address 0x4 - core index']
  #allocation1 [shape = 'u32[144,128]{1,0:T(1,128)}', space=vmem, size = 0x12000, scoped, tag = 'internal scratch']
  %s0 = inlined_call_operand.hbm [shape: f32[8,128], index: 0, kind: input, shape index: {}]
  %s1 = inlined_call_operand.hbm [shape: f32[128,256], index: 1, kind: input, shape index: {}]
  %s2 = inlined_call_operand.vmem [shape: f32[1,256], index: 2, kind: input, shape index: {}]
  %s3 = inlined_call_operand.hbm [shape: f32[256,384], index: 3, kind: input, shape index: {}]
  %s4 = inlined_call_operand.vmem [shape: f32[1,384], index: 4, kind: input, shape index: {}]
  %s5 = inlined_call_operand.hbm [shape: f32[8,384], index: 5, kind: output, shape index: {}]
  %s6 = sld [smem:[#allocation0]]
  $region42: #{tpu_custom_call.1} parent=0
    _
  %s8 = ssub.s32 1, %s6
  %s9 = scalar_select 0, %s8, %s6
  $region1: #{tpu_custom_call.1} parent=0
    #allocation2 [shape = 'u8[4096]{0}', space=vmem, size = 0x1000, scoped, tag = 'input window, operand 0, single buffered']
    #allocation3 [shape = 's32[1]{0}', space=sflag, size = 0x4, scoped, tag = 'scoped memory for tpu_custom_call.1']
    #allocation4 [shape = 's32[1]{0}', space=sflag, size = 0x4, scoped, tag = 'scoped memory for tpu_custom_call.1']
    #allocation5 [shape = 'u8[131072]{0}', space=vmem, size = 0x20000, scoped, tag = 'input window, operand 1, single buffered']
    #allocation6 [shape = 's32[1]{0}', space=sflag, size = 0x4, scoped, tag = 'scoped memory for tpu_custom_call.1']
    #allocation7 [shape = 'u8[393216]{0}', space=vmem, size = 0x60000, scoped, tag = 'input window, operand 3, single buffered']
    #allocation8 [shape = 'u8[12288]{0}', space=vmem, size = 0x3000, scoped, tag = 'output window, operand 0, single buffered']
    %10 = vsyncpa [#allocation3], 0
    %11 = vsyncpa [#allocation6], 0
    %12 = vsyncpa [#allocation4], 0
    // Predicated region
    $region2: #{tpu_custom_call.1} parent=1 // pred_check
      _
    $region3: #{tpu_custom_call.1} parent=1 // pred_check_branch
      %14 = sbr.rel (0) target = $region5
    $region4: #{tpu_custom_call.1} parent=1 // pred_region
      %s16 = ssub.s32 128, 128
      %17 = vsyncadd [#allocation3], %s16
      %s19 = sshll.u32 [#allocation2], 4
      %s20 = int_to_ptr.vmem [resolvable:$true] %s19
      %22 = dma.hbm_to_vmem [thread:$0]  %s0, 128, %s20, [#allocation3]
    $region5: #{tpu_custom_call.1} parent=1 // pred_fallthru
      _
    // Predicated region
    $region6: #{tpu_custom_call.1} parent=1 // pred_check
      _
    $region7: #{tpu_custom_call.1} parent=1 // pred_check_branch
      %24 = sbr.rel (0) target = $region9
    $region8: #{tpu_custom_call.1} parent=1 // pred_region
      %s26 = ssub.s32 4096, 4096
      %27 = vsyncadd [#allocation6], %s26
      %s28 = sshll.u32 [#allocation5], 4
      %s29 = int_to_ptr.vmem [resolvable:$true] %s28
      %34 = dma.hbm_to_vmem [thread:$0]  %s1, 4096, %s29, [#allocation6], 256, 256, 16
    $region9: #{tpu_custom_call.1} parent=1 // pred_fallthru
      _
    // Predicated region
    $region10: #{tpu_custom_call.1} parent=1 // pred_check
      _
    $region11: #{tpu_custom_call.1} parent=1 // pred_check_branch
      %36 = sbr.rel (0) target = $region13
    $region12: #{tpu_custom_call.1} parent=1 // pred_region
      _
    $region13: #{tpu_custom_call.1} parent=1 // pred_fallthru
      _
    // Predicated region
    $region14: #{tpu_custom_call.1} parent=1 // pred_check
      _
    $region15: #{tpu_custom_call.1} parent=1 // pred_check_branch
      %38 = sbr.rel (0) target = $region17
    $region16: #{tpu_custom_call.1} parent=1 // pred_region
      %s40 = ssub.s32 12288, 12288
      %41 = vsyncadd [#allocation6], %s40
      %s42 = sshll.u32 [#allocation7], 4
      %s43 = int_to_ptr.vmem [resolvable:$true] %s42
      %48 = dma.hbm_to_vmem [thread:$0]  %s3, 12288, %s43, [#allocation6], 384, 384, 24
    $region17: #{tpu_custom_call.1} parent=1 // pred_fallthru
      _
    // Predicated region
    $region18: #{tpu_custom_call.1} parent=1 // pred_check
      _
    $region19: #{tpu_custom_call.1} parent=1 // pred_check_branch
      %50 = sbr.rel (0) target = $region21
    $region20: #{tpu_custom_call.1} parent=1 // pred_region
      _
    $region21: #{tpu_custom_call.1} parent=1 // pred_fallthru
      _
    // Predicated region
    $region22: #{tpu_custom_call.1} parent=1 // pred_check
      _
    $region23: #{tpu_custom_call.1} parent=1 // pred_check_branch
      %52 = sbr.rel (0) target = $region25
    $region24: #{tpu_custom_call.1} parent=1 // pred_region
      %53 = dma.done [#allocation3], 128
    $region25: #{tpu_custom_call.1} parent=1 // pred_fallthru
      _
    // Predicated region
    $region26: #{tpu_custom_call.1} parent=1 // pred_check
      _
    $region27: #{tpu_custom_call.1} parent=1 // pred_check_branch
      %55 = sbr.rel (0) target = $region29
    $region28: #{tpu_custom_call.1} parent=1 // pred_region
      %56 = dma.done [#allocation6], 4096
    $region29: #{tpu_custom_call.1} parent=1 // pred_fallthru
      _
    // Predicated region
    $region30: #{tpu_custom_call.1} parent=1 // pred_check
      _
    $region31: #{tpu_custom_call.1} parent=1 // pred_check_branch
      %58 = sbr.rel (0) target = $region33
    $region32: #{tpu_custom_call.1} parent=1 // pred_region
      %59 = dma.done [#allocation6], 12288
    $region33: #{tpu_custom_call.1} parent=1 // pred_fallthru
      _
    %v60 = vld [vmem:[#allocation2] sm:$0xff]
    %v61 = vld [vmem:[#allocation5] sm:$0xff]
    %v62 = vld [vmem:[#allocation5 + $0x8] sm:$0xff]
    %v63 = vld [vmem:[#allocation5 + $0x10] sm:$0xff]
    %v64 = vld [vmem:[#allocation5 + $0x18] sm:$0xff]
    %v65 = vld [vmem:[#allocation5 + $0x20] sm:$0xff]
    %v66 = vld [vmem:[#allocation5 + $0x28] sm:$0xff]
    %v67 = vld [vmem:[#allocation5 + $0x30] sm:$0xff]
    %v68 = vld [vmem:[#allocation5 + $0x38] sm:$0xff]
    %v69 = vld [vmem:[#allocation5 + $0x40] sm:$0xff]
    %v70 = vld [vmem:[#allocation5 + $0x48] sm:$0xff]
    %v71 = vld [vmem:[#allocation5 + $0x50] sm:$0xff]
    %v72 = vld [vmem:[#allocation5 + $0x58] sm:$0xff]
    %v73 = vld [vmem:[#allocation5 + $0x60] sm:$0xff]
    %v74 = vld [vmem:[#allocation5 + $0x68] sm:$0xff]
    %v75 = vld [vmem:[#allocation5 + $0x70] sm:$0xff]
    %v76 = vld [vmem:[#allocation5 + $0x78] sm:$0xff]
    %v77 = vld [vmem:[#allocation5 + $0x80] sm:$0xff]
    %v78 = vld [vmem:[#allocation5 + $0x88] sm:$0xff]
    %v79 = vld [vmem:[#allocation5 + $0x90] sm:$0xff]
    %v80 = vld [vmem:[#allocation5 + $0x98] sm:$0xff]
    %v81 = vld [vmem:[#allocation5 + $0xa0] sm:$0xff]
    %v82 = vld [vmem:[#allocation5 + $0xa8] sm:$0xff]
    %v83 = vld [vmem:[#allocation5 + $0xb0] sm:$0xff]
    %v84 = vld [vmem:[#allocation5 + $0xb8] sm:$0xff]
    %v85 = vld [vmem:[#allocation5 + $0xc0] sm:$0xff]
    %v86 = vld [vmem:[#allocation5 + $0xc8] sm:$0xff]
    %v87 = vld [vmem:[#allocation5 + $0xd0] sm:$0xff]
    %v88 = vld [vmem:[#allocation5 + $0xd8] sm:$0xff]
    %v89 = vld [vmem:[#allocation5 + $0xe0] sm:$0xff]
    %v90 = vld [vmem:[#allocation5 + $0xe8] sm:$0xff]
    %v91 = vld [vmem:[#allocation5 + $0xf0] sm:$0xff]
    %v92 = vld [vmem:[#allocation5 + $0xf8] sm:$0xff]
    %v93 = vld [vmem:[%s2] sm:$0x3]
    %v95 = vlaneseq
    %v96 = vshrl.u32 %v95, 7
    %v97 = vsub.s32 0, %v96
    %v98 = vrot.slane %v93, %v97
    %v99 = vlaneseq
    %v100 = vshrl.u32 %v99, 7
    %v101 = vsub.s32 1, %v100
    %v102 = vrot.slane %v93, %v101
    %105 = vmatprep.subr.mxu0 %v62
    %106 = vmatpush1.msra.mxu0 %v61
    %107 = vmatprep.subr.mxu0 %v64
    %108 = vmatpush1.msra.mxu0 %v63
    %109 = vmatprep.subr.mxu0 %v66
    %110 = vmatpush1.msra.mxu0 %v65
    %111 = vmatprep.subr.mxu0 %v68
    %112 = vmatpush1.msra.mxu0 %v67
    %113 = vmatprep.subr.mxu0 %v70
    %114 = vmatpush1.msra.mxu0 %v69
    %115 = vmatprep.subr.mxu0 %v72
    %116 = vmatpush1.msra.mxu0 %v71
    %117 = vmatprep.subr.mxu0 %v74
    %118 = vmatpush1.msra.mxu0 %v73
    %119 = vmatprep.subr.mxu0 %v76
    %120 = vmatpush1.msra.mxu0 %v75
    %121 = vmatprep.subr.mxu0 %v78
    %122 = vmatpush1.msra.mxu0 %v77
    %123 = vmatprep.subr.mxu0 %v80
    %124 = vmatpush1.msra.mxu0 %v79
    %125 = vmatprep.subr.mxu0 %v82
    %126 = vmatpush1.msra.mxu0 %v81
    %127 = vmatprep.subr.mxu0 %v84
    %128 = vmatpush1.msra.mxu0 %v83
    %129 = vmatprep.subr.mxu0 %v86
    %130 = vmatpush1.msra.mxu0 %v85
    %131 = vmatprep.subr.mxu0 %v88
    %132 = vmatpush1.msra.mxu0 %v87
    %133 = vmatprep.subr.mxu0 %v90
    %134 = vmatpush1.msra.mxu0 %v89
    %135 = vmatprep.subr.mxu0 %v92
    %136 = vmatpush1.msra.mxu0 %v91
    %137 = vmatprep.subr.mxu0 0.0
    %138 = vmatpush1.msra.mxu0 0.0
    %139 = vmatprep.subr.mxu0 0.0
    %140 = vmatpush1.msra.mxu0 0.0
    %141 = vmatprep.subr.mxu0 0.0
    %142 = vmatpush1.msra.mxu0 0.0
    %143 = vmatprep.subr.mxu0 0.0
    %144 = vmatpush1.msra.mxu0 0.0
    %145 = vmatprep.subr.mxu0 0.0
    %146 = vmatpush1.msra.mxu0 0.0
    %147 = vmatprep.subr.mxu0 0.0
    %148 = vmatpush1.msra.mxu0 0.0
    %149 = vmatprep.subr.mxu0 0.0
    %150 = vmatpush1.msra.mxu0 0.0
    %151 = vmatprep.subr.mxu0 0.0
    %152 = vmatpush1.msra.mxu0 0.0
    %153 = vmatprep.subr.mxu0 0.0
    %154 = vmatpush1.msra.mxu0 0.0
    %155 = vmatprep.subr.mxu0 0.0
    %156 = vmatpush1.msra.mxu0 0.0
    %157 = vmatprep.subr.mxu0 0.0
    %158 = vmatpush1.msra.mxu0 0.0
    %159 = vmatprep.subr.mxu0 0.0
    %160 = vmatpush1.msra.mxu0 0.0
    %161 = vmatprep.subr.mxu0 0.0
    %162 = vmatpush1.msra.mxu0 0.0
    %163 = vmatprep.subr.mxu0 0.0
    %164 = vmatpush1.msra.mxu0 0.0
    %165 = vmatprep.subr.mxu0 0.0
    %166 = vmatpush1.msra.mxu0 0.0
    %167 = vmatprep.subr.mxu0 0.0
    %168 = vmatpush1.msra.mxu0 0.0
    %169 = vmatprep.mubr.f32.mxu0 0.0
    %170 = vmatmul.mubr.f32.gmra.mrb[0].mxu0 %v60
    %v171 = vpop.f32.mrb[0].mxu0
    %v172 = vadd.f32 %v98, %v171
    %v173 = vpop.f32.mrb[0].mxu0
    %v174 = vadd.f32 %v102, %v173
    %175 = vdwg.mxu0
    %v176 = vmax.f32 %v172, 0.0
    %v177 = vmax.f32 %v174, 0.0
    %v178 = vld [vmem:[#allocation7] sm:$0xff]
    %v179 = vld [vmem:[#allocation7 + $0x8] sm:$0xff]
    %v180 = vld [vmem:[#allocation7 + $0x10] sm:$0xff]
    %v181 = vld [vmem:[#allocation7 + $0x18] sm:$0xff]
    %v182 = vld [vmem:[#allocation7 + $0x20] sm:$0xff]
    %v183 = vld [vmem:[#allocation7 + $0x28] sm:$0xff]
    %v184 = vld [vmem:[#allocation7 + $0x30] sm:$0xff]
    %v185 = vld [vmem:[#allocation7 + $0x38] sm:$0xff]
    %v186 = vld [vmem:[#allocation7 + $0x40] sm:$0xff]
    %v187 = vld [vmem:[#allocation7 + $0x48] sm:$0xff]
    %v188 = vld [vmem:[#allocation7 + $0x50] sm:$0xff]
    %v189 = vld [vmem:[#allocation7 + $0x58] sm:$0xff]
    %v190 = vld [vmem:[#allocation7 + $0x60] sm:$0xff]
    %v191 = vld [vmem:[#allocation7 + $0x68] sm:$0xff]
    %v192 = vld [vmem:[#allocation7 + $0x70] sm:$0xff]
    %v193 = vld [vmem:[#allocation7 + $0x78] sm:$0xff]
    %v194 = vld [vmem:[#allocation7 + $0x80] sm:$0xff]
    %v195 = vld [vmem:[#allocation7 + $0x88] sm:$0xff]
    %v196 = vld [vmem:[#allocation7 + $0x90] sm:$0xff]
    %v197 = vld [vmem:[#allocation7 + $0x98] sm:$0xff]
    %v198 = vld [vmem:[#allocation7 + $0xa0] sm:$0xff]
    %v199 = vld [vmem:[#allocation7 + $0xa8] sm:$0xff]
    %v200 = vld [vmem:[#allocation7 + $0xb0] sm:$0xff]
    %v201 = vld [vmem:[#allocation7 + $0xb8] sm:$0xff]
    %v202 = vld [vmem:[#allocation7 + $0xc0] sm:$0xff]
    %v203 = vld [vmem:[#allocation7 + $0xc8] sm:$0xff]
    %v204 = vld [vmem:[#allocation7 + $0xd0] sm:$0xff]
    %v205 = vld [vmem:[#allocation7 + $0xd8] sm:$0xff]
    %v206 = vld [vmem:[#allocation7 + $0xe0] sm:$0xff]
    %v207 = vld [vmem:[#allocation7 + $0xe8] sm:$0xff]
    %v208 = vld [vmem:[#allocation7 + $0xf0] sm:$0xff]
    %v209 = vld [vmem:[#allocation7 + $0xf8] sm:$0xff]
    %v210 = vld [vmem:[#allocation7 + $0x100] sm:$0xff]
    %v211 = vld [vmem:[#allocation7 + $0x108] sm:$0xff]
    %v212 = vld [vmem:[#allocation7 + $0x110] sm:$0xff]
    %v213 = vld [vmem:[#allocation7 + $0x118] sm:$0xff]
    %v214 = vld [vmem:[#allocation7 + $0x120] sm:$0xff]
    %v215 = vld [vmem:[#allocation7 + $0x128] sm:$0xff]
    %v216 = vld [vmem:[#allocation7 + $0x130] sm:$0xff]
    %v217 = vld [vmem:[#allocation7 + $0x138] sm:$0xff]
    %v218 = vld [vmem:[#allocation7 + $0x140] sm:$0xff]
    %v219 = vld [vmem:[#allocation7 + $0x148] sm:$0xff]
    %v220 = vld [vmem:[#allocation7 + $0x150] sm:$0xff]
    %v221 = vld [vmem:[#allocation7 + $0x158] sm:$0xff]
    %v222 = vld [vmem:[#allocation7 + $0x160] sm:$0xff]
    %v223 = vld [vmem:[#allocation7 + $0x168] sm:$0xff]
    %v224 = vld [vmem:[#allocation7 + $0x170] sm:$0xff]
    %v225 = vld [vmem:[#allocation7 + $0x178] sm:$0xff]
    %v226 = vld [vmem:[#allocation7 + $0x180] sm:$0xff]
    %v227 = vld [vmem:[#allocation7 + $0x188] sm:$0xff]
    %v228 = vld [vmem:[#allocation7 + $0x190] sm:$0xff]
    %v229 = vld [vmem:[#allocation7 + $0x198] sm:$0xff]
    %v230 = vld [vmem:[#allocation7 + $0x1a0] sm:$0xff]
    %v231 = vld [vmem:[#allocation7 + $0x1a8] sm:$0xff]
    %v232 = vld [vmem:[#allocation7 + $0x1b0] sm:$0xff]
    %v233 = vld [vmem:[#allocation7 + $0x1b8] sm:$0xff]
    %v234 = vld [vmem:[#allocation7 + $0x1c0] sm:$0xff]
    %v235 = vld [vmem:[#allocation7 + $0x1c8] sm:$0xff]
    %v236 = vld [vmem:[#allocation7 + $0x1d0] sm:$0xff]
    %v237 = vld [vmem:[#allocation7 + $0x1d8] sm:$0xff]
    %v238 = vld [vmem:[#allocation7 + $0x1e0] sm:$0xff]
    %v239 = vld [vmem:[#allocation7 + $0x1e8] sm:$0xff]
    %v240 = vld [vmem:[#allocation7 + $0x1f0] sm:$0xff]
    %v241 = vld [vmem:[#allocation7 + $0x1f8] sm:$0xff]
    %v242 = vld [vmem:[#allocation7 + $0x200] sm:$0xff]
    %v243 = vld [vmem:[#allocation7 + $0x208] sm:$0xff]
    %v244 = vld [vmem:[#allocation7 + $0x210] sm:$0xff]
    %v245 = vld [vmem:[#allocation7 + $0x218] sm:$0xff]
    %v246 = vld [vmem:[#allocation7 + $0x220] sm:$0xff]
    %v247 = vld [vmem:[#allocation7 + $0x228] sm:$0xff]
    %v248 = vld [vmem:[#allocation7 + $0x230] sm:$0xff]
    %v249 = vld [vmem:[#allocation7 + $0x238] sm:$0xff]
    %v250 = vld [vmem:[#allocation7 + $0x240] sm:$0xff]
    %v251 = vld [vmem:[#allocation7 + $0x248] sm:$0xff]
    %v252 = vld [vmem:[#allocation7 + $0x250] sm:$0xff]
    %v253 = vld [vmem:[#allocation7 + $0x258] sm:$0xff]
    %v254 = vld [vmem:[#allocation7 + $0x260] sm:$0xff]
    %v255 = vld [vmem:[#allocation7 + $0x268] sm:$0xff]
    %v256 = vld [vmem:[#allocation7 + $0x270] sm:$0xff]
    %v257 = vld [vmem:[#allocation7 + $0x278] sm:$0xff]
    %v258 = vld [vmem:[#allocation7 + $0x280] sm:$0xff]
    %v259 = vld [vmem:[#allocation7 + $0x288] sm:$0xff]
    %v260 = vld [vmem:[#allocation7 + $0x290] sm:$0xff]
    %v261 = vld [vmem:[#allocation7 + $0x298] sm:$0xff]
    %v262 = vld [vmem:[#allocation7 + $0x2a0] sm:$0xff]
    %v263 = vld [vmem:[#allocation7 + $0x2a8] sm:$0xff]
    %v264 = vld [vmem:[#allocation7 + $0x2b0] sm:$0xff]
    %v265 = vld [vmem:[#allocation7 + $0x2b8] sm:$0xff]
    %v266 = vld [vmem:[#allocation7 + $0x2c0] sm:$0xff]
    %v267 = vld [vmem:[#allocation7 + $0x2c8] sm:$0xff]
    %v268 = vld [vmem:[#allocation7 + $0x2d0] sm:$0xff]
    %v269 = vld [vmem:[#allocation7 + $0x2d8] sm:$0xff]
    %v270 = vld [vmem:[#allocation7 + $0x2e0] sm:$0xff]
    %v271 = vld [vmem:[#allocation7 + $0x2e8] sm:$0xff]
    %v272 = vld [vmem:[#allocation7 + $0x2f0] sm:$0xff]
    %v273 = vld [vmem:[#allocation7 + $0x2f8] sm:$0xff]
    %v274 = vld [vmem:[%s4] sm:$0x7]
    %v276 = vlaneseq
    %v277 = vshrl.u32 %v276, 7
    %v278 = vsub.s32 0, %v277
    %v279 = vrot.slane %v274, %v278
    %v280 = vlaneseq
    %v281 = vshrl.u32 %v280, 7
    %v282 = vsub.s32 1, %v281
    %v283 = vrot.slane %v274, %v282
    %v284 = vlaneseq
    %v285 = vshrl.u32 %v284, 7
    %v286 = vsub.s32 2, %v285
    %v287 = vrot.slane %v274, %v286
    %291 = vmatprep.subr.mxu0 %v179
    %292 = vmatpush1.msra.mxu0 %v178
    %293 = vmatprep.subr.mxu0 %v182
    %294 = vmatpush1.msra.mxu0 %v181
    %295 = vmatprep.subr.mxu0 %v185
    %296 = vmatpush1.msra.mxu0 %v184
    %297 = vmatprep.subr.mxu0 %v188
    %298 = vmatpush1.msra.mxu0 %v187
    %299 = vmatprep.subr.mxu0 %v191
    %300 = vmatpush1.msra.mxu0 %v190
    %301 = vmatprep.subr.mxu0 %v194
    %302 = vmatpush1.msra.mxu0 %v193
    %303 = vmatprep.subr.mxu0 %v197
    %304 = vmatpush1.msra.mxu0 %v196
    %305 = vmatprep.subr.mxu0 %v200
    %306 = vmatpush1.msra.mxu0 %v199
    %307 = vmatprep.subr.mxu0 %v203
    %308 = vmatpush1.msra.mxu0 %v202
    %309 = vmatprep.subr.mxu0 %v206
    %310 = vmatpush1.msra.mxu0 %v205
    %311 = vmatprep.subr.mxu0 %v209
    %312 = vmatpush1.msra.mxu0 %v208
    %313 = vmatprep.subr.mxu0 %v212
    %314 = vmatpush1.msra.mxu0 %v211
    %315 = vmatprep.subr.mxu0 %v215
    %316 = vmatpush1.msra.mxu0 %v214
    %317 = vmatprep.subr.mxu0 %v218
    %318 = vmatpush1.msra.mxu0 %v217
    %319 = vmatprep.subr.mxu0 %v221
    %320 = vmatpush1.msra.mxu0 %v220
    %321 = vmatprep.subr.mxu0 %v224
    %322 = vmatpush1.msra.mxu0 %v223
    %323 = vmatprep.subr.mxu0 %v227
    %324 = vmatpush1.msra.mxu0 %v226
    %325 = vmatprep.subr.mxu0 %v230
    %326 = vmatpush1.msra.mxu0 %v229
    %327 = vmatprep.subr.mxu0 %v233
    %328 = vmatpush1.msra.mxu0 %v232
    %329 = vmatprep.subr.mxu0 %v236
    %330 = vmatpush1.msra.mxu0 %v235
    %331 = vmatprep.subr.mxu0 %v239
    %332 = vmatpush1.msra.mxu0 %v238
    %333 = vmatprep.subr.mxu0 %v242
    %334 = vmatpush1.msra.mxu0 %v241
    %335 = vmatprep.subr.mxu0 %v245
    %336 = vmatpush1.msra.mxu0 %v244
    %337 = vmatprep.subr.mxu0 %v248
    %338 = vmatpush1.msra.mxu0 %v247
    %339 = vmatprep.subr.mxu0 %v251
    %340 = vmatpush1.msra.mxu0 %v250
    %341 = vmatprep.subr.mxu0 %v254
    %342 = vmatpush1.msra.mxu0 %v253
    %343 = vmatprep.subr.mxu0 %v257
    %344 = vmatpush1.msra.mxu0 %v256
    %345 = vmatprep.subr.mxu0 %v260
    %346 = vmatpush1.msra.mxu0 %v259
    %347 = vmatprep.subr.mxu0 %v263
    %348 = vmatpush1.msra.mxu0 %v262
    %349 = vmatprep.subr.mxu0 %v266
    %350 = vmatpush1.msra.mxu0 %v265
    %351 = vmatprep.subr.mxu0 %v269
    %352 = vmatpush1.msra.mxu0 %v268
    %353 = vmatprep.subr.mxu0 %v272
    %354 = vmatpush1.msra.mxu0 %v271
    %355 = vmatprep.mubr.f32.mxu0 %v177
    %356 = vmatmul.mubr.f32.gmra.mrb[0].mxu0 %v176
    %v357 = vpop.f32.mrb[0].mxu0
    %v358 = vadd.f32 %v279, %v357
    %v359 = vpop.f32.mrb[0].mxu0
    %v360 = vadd.f32 %v283, %v359
    %361 = vdwg.mxu0
    %362 = vmatprep.subr.mxu0 0.0
    %363 = vmatpush1.msra.mxu0 %v180
    %364 = vmatprep.subr.mxu0 0.0
    %365 = vmatpush1.msra.mxu0 %v183
    %366 = vmatprep.subr.mxu0 0.0
    %367 = vmatpush1.msra.mxu0 %v186
    %368 = vmatprep.subr.mxu0 0.0
    %369 = vmatpush1.msra.mxu0 %v189
    %370 = vmatprep.subr.mxu0 0.0
    %371 = vmatpush1.msra.mxu0 %v192
    %372 = vmatprep.subr.mxu0 0.0
    %373 = vmatpush1.msra.mxu0 %v195
    %374 = vmatprep.subr.mxu0 0.0
    %375 = vmatpush1.msra.mxu0 %v198
    %376 = vmatprep.subr.mxu0 0.0
    %377 = vmatpush1.msra.mxu0 %v201
    %378 = vmatprep.subr.mxu0 0.0
    %379 = vmatpush1.msra.mxu0 %v204
    %380 = vmatprep.subr.mxu0 0.0
    %381 = vmatpush1.msra.mxu0 %v207
    %382 = vmatprep.subr.mxu0 0.0
    %383 = vmatpush1.msra.mxu0 %v210
    %384 = vmatprep.subr.mxu0 0.0
    %385 = vmatpush1.msra.mxu0 %v213
    %386 = vmatprep.subr.mxu0 0.0
    %387 = vmatpush1.msra.mxu0 %v216
    %388 = vmatprep.subr.mxu0 0.0
    %389 = vmatpush1.msra.mxu0 %v219
    %390 = vmatprep.subr.mxu0 0.0
    %391 = vmatpush1.msra.mxu0 %v222
    %392 = vmatprep.subr.mxu0 0.0
    %393 = vmatpush1.msra.mxu0 %v225
    %394 = vmatprep.subr.mxu0 0.0
    %395 = vmatpush1.msra.mxu0 %v228
    %396 = vmatprep.subr.mxu0 0.0
    %397 = vmatpush1.msra.mxu0 %v231
    %398 = vmatprep.subr.mxu0 0.0
    %399 = vmatpush1.msra.mxu0 %v234
    %400 = vmatprep.subr.mxu0 0.0
    %401 = vmatpush1.msra.mxu0 %v237
    %402 = vmatprep.subr.mxu0 0.0
    %403 = vmatpush1.msra.mxu0 %v240
    %404 = vmatprep.subr.mxu0 0.0
    %405 = vmatpush1.msra.mxu0 %v243
    %406 = vmatprep.subr.mxu0 0.0
    %407 = vmatpush1.msra.mxu0 %v246
    %408 = vmatprep.subr.mxu0 0.0
    %409 = vmatpush1.msra.mxu0 %v249
    %410 = vmatprep.subr.mxu0 0.0
    %411 = vmatpush1.msra.mxu0 %v252
    %412 = vmatprep.subr.mxu0 0.0
    %413 = vmatpush1.msra.mxu0 %v255
    %414 = vmatprep.subr.mxu0 0.0
    %415 = vmatpush1.msra.mxu0 %v258
    %416 = vmatprep.subr.mxu0 0.0
    %417 = vmatpush1.msra.mxu0 %v261
    %418 = vmatprep.subr.mxu0 0.0
    %419 = vmatpush1.msra.mxu0 %v264
    %420 = vmatprep.subr.mxu0 0.0
    %421 = vmatpush1.msra.mxu0 %v267
    %422 = vmatprep.subr.mxu0 0.0
    %423 = vmatpush1.msra.mxu0 %v270
    %424 = vmatprep.subr.mxu0 0.0
    %425 = vmatpush1.msra.mxu0 %v273
    %426 = vmatprep.mubr.f32.mxu0 %v177
    %427 = vmatmul.mubr.f32.gmra.mrb[0].mxu0 %v176
    %v428 = vpop.f32.mrb[0].mxu0
    %v429 = vadd.f32 %v287, %v428
    %v430 = vpop.f32.mrb[0].mxu0
    %431 = vdwg.mxu0
    %432 = vst [vmem:[#allocation8] sm:$0xff] %v358
    %433 = vst [vmem:[#allocation8 + $0x8] sm:$0xff] %v360
    %434 = vst [vmem:[#allocation8 + $0x10] sm:$0xff] %v429
    // Predicated region
    $region34: #{tpu_custom_call.1} parent=1 // pred_check
      _
    $region35: #{tpu_custom_call.1} parent=1 // pred_check_branch
      %436 = sbr.rel (0) target = $region37
    $region36: #{tpu_custom_call.1} parent=1 // pred_region
      %s438 = ssub.s32 384, 384
      %439 = vsyncadd [#allocation4], %s438
      %s441 = sshll.u32 [#allocation8], 4
      %s442 = int_to_ptr.vmem [resolvable:$true] %s441
      %444 = dma.vmem_to_hbm [thread:$0]  %s442, 384, %s5, [#allocation4]
    $region37: #{tpu_custom_call.1} parent=1 // pred_fallthru
      _
    // Predicated region
    $region38: #{tpu_custom_call.1} parent=1 // pred_check
      _
    $region39: #{tpu_custom_call.1} parent=1 // pred_check_branch
      %446 = sbr.rel (0) target = $region41
    $region40: #{tpu_custom_call.1} parent=1 // pred_region
      %447 = dma.done [#allocation4], 384
    $region41: #{tpu_custom_call.1} parent=1 // pred_fallthru
      _
    %448 = vsyncpa [#allocation3], 1
    %449 = vsyncpa [#allocation6], 1
    %450 = vsyncpa [#allocation4], 1

</llo_original>
